<compile_context>
chip_gen: v5e
topology: v5e:2x2
jax: 0.10.0
libtpu: 0.0.40
codegen_flags: <defaults>
</compile_context>

<pallas_src>
import functools
import math

import jax
import jax.numpy as jnp
from jax.experimental import pallas as pl
from jax.experimental.pallas import tpu as pltpu

LN_EPS = 1e-5


def _layer_norm(x, w, b):
    mu = jnp.mean(x, axis=-1, keepdims=True)
    var = jnp.mean(jnp.square(x - mu), axis=-1, keepdims=True)
    return (x - mu) * jax.lax.rsqrt(var + LN_EPS) * w + b


def _gelu_tanh(x):
    # TODO(synk): PyTorch nn.GELU() defaults to the exact erf form; the tanh
    # approximation is used here (and in the reference) for portable lowering.
    c = math.sqrt(2.0 / math.pi)
    return 0.5 * x * (1.0 + jnp.tanh(c * (x + 0.044715 * x * x * x)))


# ----------------------------- Pallas kernels ------------------------------

def _encoder_block_kernel(n_head,
                          x_ref, mask_ref,
                          ln1_w_ref, ln1_b_ref, w_qkv_ref, b_qkv_ref,
                          w_proj_ref, b_proj_ref,
                          ln2_w_ref, ln2_b_ref, w_fc_ref, b_fc_ref,
                          w_pr_ref, b_pr_ref,
                          o_ref):
    B, T, E = x_ref.shape
    Hd = E // n_head

    x = x_ref[...]                                  # (B, T, E)
    mask = mask_ref[...]                            # (B, 1, T) additive (-1e30 on pads)

    # ---- attention sub-block: x = x + c_proj(concat_h(attn_h(ln1(x)))) ----
    xn = _layer_norm(x, ln1_w_ref[...], ln1_b_ref[...])
    qkv = jnp.dot(xn.reshape(B * T, E), w_qkv_ref[...],
                  preferred_element_type=jnp.float32) + b_qkv_ref[...]
    qkv = qkv.reshape(B, T, 3 * E)                  # [q_allheads | k_allheads | v_allheads]

    heads = []
    for h in range(n_head):
        q = qkv[:, :, h * Hd:(h + 1) * Hd]                      # pre-scaled by 1/sqrt(Hd)
        k = qkv[:, :, E + h * Hd:E + (h + 1) * Hd]
        v = qkv[:, :, 2 * E + h * Hd:2 * E + (h + 1) * Hd]
        att = jnp.einsum('bqd,bkd->bqk', q, k,
                         preferred_element_type=jnp.float32) + mask
        m = jnp.max(att, axis=-1, keepdims=True)
        p = jnp.exp(att - m)
        s = jnp.sum(p, axis=-1, keepdims=True)
        y = jnp.einsum('bqk,bkd->bqd', p, v,
                       preferred_element_type=jnp.float32)
        heads.append(y / s)                         # normalize on (T,Hd), not (T,T)
    y = jnp.concatenate(heads, axis=-1)             # (B, T, E) lane-dense
    y = jnp.dot(y.reshape(B * T, E), w_proj_ref[...],
                preferred_element_type=jnp.float32) + b_proj_ref[...]
    x = x + y.reshape(B, T, E)

    # ---- MLP sub-block: x = x + c_proj(gelu(c_fc(ln2(x)))) ----
    xn2 = _layer_norm(x, ln2_w_ref[...], ln2_b_ref[...])
    hmid = jnp.dot(xn2.reshape(B * T, E), w_fc_ref[...],
                   preferred_element_type=jnp.float32) + b_fc_ref[...]
    hmid = _gelu_tanh(hmid)
    y2 = jnp.dot(hmid, w_pr_ref[...],
                 preferred_element_type=jnp.float32) + b_pr_ref[...]
    o_ref[...] = x + y2.reshape(B, T, E)
    # TODO(synk): attn/resid/MLP/embedding dropouts are identity (eval mode).


def _final_head_kernel(x_ref, ln_w_ref, ln_b_ref, w_head_ref, o_ref):
    B, T, E = x_ref.shape
    V = w_head_ref.shape[1]
    xn = _layer_norm(x_ref[...], ln_w_ref[...], ln_b_ref[...])
    logits = jnp.dot(xn.reshape(B * T, E), w_head_ref[...],
                     preferred_element_type=jnp.float32)
    o_ref[...] = logits.reshape(B, T, V)


# ------------------------------ wrappers ------------------------------------

_VMEM = pl.BlockSpec(memory_space=pltpu.MemorySpace.VMEM)


def _encoder_block(x, mask_add, pk, n_head):
    B, T, E = x.shape
    operands = (x, mask_add,
                pk['ln1_w'], pk['ln1_b'], pk['w_qkv'], pk['b_qkv'],
                pk['w_proj'], pk['b_proj'],
                pk['ln2_w'], pk['ln2_b'], pk['w_fc'], pk['b_fc'],
                pk['w_pr'], pk['b_pr'])
    return pl.pallas_call(
        functools.partial(_encoder_block_kernel, n_head),
        out_shape=jax.ShapeDtypeStruct((B, T, E), jnp.float32),
        in_specs=[_VMEM] * len(operands),
        out_specs=_VMEM,
    )(*operands)


def _final_head(x, lnf_w, lnf_b, w_head):
    B, T, E = x.shape
    V = w_head.shape[1]
    return pl.pallas_call(
        _final_head_kernel,
        out_shape=jax.ShapeDtypeStruct((B, T, V), jnp.float32),
        in_specs=[_VMEM] * 4,
        out_specs=_VMEM,
    )(x, lnf_w, lnf_b, w_head)


def _pack_layer(layer, n_head):
    """Fuse per-head q/k/v weights into one (E, 3E) matrix; fold in 1/sqrt(Hd)."""
    E = layer['wo'].shape[0]
    Hd = E // n_head
    scale = 1.0 / math.sqrt(Hd)
    # (n_head, E, Hd) -> (E, n_head*Hd); head h occupies columns [h*Hd:(h+1)*Hd]
    wq = jnp.transpose(layer['wq'], (1, 0, 2)).reshape(E, E) * scale
    wk = jnp.transpose(layer['wk'], (1, 0, 2)).reshape(E, E)
    wv = jnp.transpose(layer['wv'], (1, 0, 2)).reshape(E, E)
    bq = layer['bq'].reshape(E) * scale
    bk = layer['bk'].reshape(E)
    bv = layer['bv'].reshape(E)
    four_e = layer['wfc'].shape[1]
    return dict(
        ln1_w=layer['ln1_w'].reshape(1, E), ln1_b=layer['ln1_b'].reshape(1, E),
        w_qkv=jnp.concatenate([wq, wk, wv], axis=1),
        b_qkv=jnp.concatenate([bq, bk, bv]).reshape(1, 3 * E),
        w_proj=layer['wo'], b_proj=layer['bo'].reshape(1, E),
        ln2_w=layer['ln2_w'].reshape(1, E), ln2_b=layer['ln2_b'].reshape(1, E),
        w_fc=layer['wfc'], b_fc=layer['bfc'].reshape(1, four_e),
        w_pr=layer['wpr'], b_pr=layer['bpr'].reshape(1, E),
    )


def encoder_transformer_pallas(params, inputs, n_head):
    B, T = inputs.shape
    E = params['wte'].shape[1]
    pad = inputs == 0
    mask_add = jnp.where(pad, -1e30, 0.0).astype(jnp.float32)[:, None, :]  # (B,1,T)
    # Embedding gather + position add in plain JAX (gather has no cheap BlockSpec form
    # at this scale).
    x = (params['wte'][inputs] + params['wpe'][:T][None, :, :]).astype(jnp.float32)
    for layer in params['layers']:
        pk = _pack_layer(layer, n_head)
        x = _encoder_block(x, mask_add, pk, n_head)
    return _final_head(x, params['lnf_w'].reshape(1, E),
                       params['lnf_b'].reshape(1, E), params['w_head'])


# ------------------------------ reference -----------------------------------

def encoder_transformer_reference(params, inputs, n_head):
    pad = inputs == 0
    T = inputs.shape[1]
    x = params['wte'][inputs] + params['wpe'][:T][None, :, :]
    for layer in params['layers']:
        xn = _layer_norm(x, layer['ln1_w'], layer['ln1_b'])
        Hd = layer['wq'].shape[-1]
        heads = []
        for h in range(n_head):
            q = xn @ layer['wq'][h] + layer['bq'][h]
            k = xn @ layer['wk'][h] + layer['bk'][h]
            v = xn @ layer['wv'][h] + layer['bv'][h]
            att = (q @ jnp.swapaxes(k, -1, -2)) * (1.0 / math.sqrt(Hd))
            att = jnp.where(pad[:, None, :], -jnp.inf, att)
            att = jax.nn.softmax(att, axis=-1)
            heads.append(att @ v)
        y = jnp.concatenate(heads, axis=-1)
        x = x + (y @ layer['wo'] + layer['bo'])
        xn2 = _layer_norm(x, layer['ln2_w'], layer['ln2_b'])
        hmid = _gelu_tanh(xn2 @ layer['wfc'] + layer['bfc'])
        x = x + (hmid @ layer['wpr'] + layer['bpr'])
    xf = _layer_norm(x, params['lnf_w'], params['lnf_b'])
    return xf @ params['w_head']


# ------------------------------- test ---------------------------------------

def init_params(key, n_embd, n_head, n_layer, input_vocab, output_vocab, max_len):
    Hd = n_embd // n_head
    keys = iter(jax.random.split(key, 64))

    def nrm(shape, std=0.02):
        return (std * jax.random.normal(next(keys), shape)).astype(jnp.float32)

    layers = []
    for _ in range(n_layer):
        layers.append(dict(
            ln1_w=1.0 + nrm((n_embd,)), ln1_b=nrm((n_embd,)),
            wq=nrm((n_head, n_embd, Hd)), bq=nrm((n_head, Hd)),
            wk=nrm((n_head, n_embd, Hd)), bk=nrm((n_head, Hd)),
            wv=nrm((n_head, n_embd, Hd)), bv=nrm((n_head, Hd)),
            wo=nrm((n_embd, n_embd)), bo=nrm((n_embd,)),
            ln2_w=1.0 + nrm((n_embd,)), ln2_b=nrm((n_embd,)),
            wfc=nrm((n_embd, 4 * n_embd)), bfc=nrm((4 * n_embd,)),
            wpr=nrm((4 * n_embd, n_embd)), bpr=nrm((n_embd,)),
        ))
    return dict(
        wte=nrm((input_vocab, n_embd)),
        wpe=nrm((max_len, n_embd)),
        layers=layers,
        lnf_w=1.0 + nrm((n_embd,)), lnf_b=nrm((n_embd,)),
        w_head=nrm((n_embd, output_vocab)),
    )


if __name__ == "__main__":
    B, T = 2, 8
    n_embd, n_head, n_layer = 32, 4, 2
    input_vocab, output_vocab, max_len = 11, 16, 16

    root = jax.random.PRNGKey(0)
    k_params, k_tok = jax.random.split(root)
    params = init_params(k_params, n_embd, n_head, n_layer,
                         input_vocab, output_vocab, max_len)

    # Token ids; id 0 is padding (padding_mask = inputs == 0 inside the forward).
    lengths = jnp.array([6, 5])
    tok = jax.random.randint(k_tok, (B, T), 1, input_vocab)
    inputs = jnp.where(jnp.arange(T)[None, :] < lengths[:, None], tok, 0)

    out = encoder_transformer_pallas(params, inputs, n_head)
    out = jax.block_until_ready(out)

    ref = encoder_transformer_reference(params, inputs, n_head)
    assert out.shape == (B, T, output_vocab)
    err = float(jnp.max(jnp.abs(out - ref)))
    assert jnp.allclose(out, ref, atol=5e-4, rtol=5e-4), f"mismatch vs reference (max abs err {err})"

    print("KERNEL_OK")
</pallas_src>

<mosaic_0001>
module attributes {stable_mosaic.version = 11 : i64} {
  func.func @_encoder_block_kernel(%arg0: memref<2x8x32xf32, #tpu.memory_space<vmem>>, %arg1: memref<2x1x8xf32, #tpu.memory_space<vmem>>, %arg2: memref<1x32xf32, #tpu.memory_space<vmem>>, %arg3: memref<1x32xf32, #tpu.memory_space<vmem>>, %arg4: memref<32x96xf32, #tpu.memory_space<vmem>>, %arg5: memref<1x96xf32, #tpu.memory_space<vmem>>, %arg6: memref<32x32xf32, #tpu.memory_space<vmem>>, %arg7: memref<1x32xf32, #tpu.memory_space<vmem>>, %arg8: memref<1x32xf32, #tpu.memory_space<vmem>>, %arg9: memref<1x32xf32, #tpu.memory_space<vmem>>, %arg10: memref<32x128xf32, #tpu.memory_space<vmem>>, %arg11: memref<1x128xf32, #tpu.memory_space<vmem>>, %arg12: memref<128x32xf32, #tpu.memory_space<vmem>>, %arg13: memref<1x32xf32, #tpu.memory_space<vmem>>, %arg14: memref<2x8x32xf32, #tpu.memory_space<vmem>>) attributes {dimension_semantics = [], scalar_prefetch = 0 : i64, scratch_operands = 0 : i64, tpu.core_type = #tpu.core_type<tc>} {
    %c0 = arith.constant 0 : index
    %c0_0 = arith.constant 0 : index
    %c0_1 = arith.constant 0 : index
    %0 = vector.load %arg0[%c0, %c0_0, %c0_1] : memref<2x8x32xf32, #tpu.memory_space<vmem>>, vector<2x8x32xf32>
    %c0_2 = arith.constant 0 : index
    %c0_3 = arith.constant 0 : index
    %c0_4 = arith.constant 0 : index
    %1 = vector.load %arg1[%c0_2, %c0_3, %c0_4] : memref<2x1x8xf32, #tpu.memory_space<vmem>>, vector<2x1x8xf32>
    %c0_5 = arith.constant 0 : index
    %c0_6 = arith.constant 0 : index
    %2 = vector.load %arg2[%c0_5, %c0_6] : memref<1x32xf32, #tpu.memory_space<vmem>>, vector<1x32xf32>
    %c0_7 = arith.constant 0 : index
    %c0_8 = arith.constant 0 : index
    %3 = vector.load %arg3[%c0_7, %c0_8] : memref<1x32xf32, #tpu.memory_space<vmem>>, vector<1x32xf32>
    %cst = arith.constant dense<0.000000e+00> : vector<2x8xf32>
    %4 = vector.multi_reduction <add>, %0, %cst [2] : vector<2x8x32xf32> to vector<2x8xf32>
    %5 = vector.shape_cast %4 : vector<2x8xf32> to vector<2x8x1xf32>
    %cst_9 = arith.constant 3.200000e+01 : f32
    %6 = vector.broadcast %cst_9 : f32 to vector<2x8x1xf32>
    %7 = arith.divf %5, %6 : vector<2x8x1xf32>
    %8 = vector.broadcast %7 : vector<2x8x1xf32> to vector<2x8x32xf32>
    %9 = arith.subf %0, %8 : vector<2x8x32xf32>
    %10 = arith.mulf %9, %9 : vector<2x8x32xf32>
    %cst_10 = arith.constant dense<0.000000e+00> : vector<2x8xf32>
    %11 = vector.multi_reduction <add>, %10, %cst_10 [2] : vector<2x8x32xf32> to vector<2x8xf32>
    %12 = vector.shape_cast %11 : vector<2x8xf32> to vector<2x8x1xf32>
    %cst_11 = arith.constant 3.200000e+01 : f32
    %13 = vector.broadcast %cst_11 : f32 to vector<2x8x1xf32>
    %14 = arith.divf %12, %13 : vector<2x8x1xf32>
    %15 = vector.broadcast %7 : vector<2x8x1xf32> to vector<2x8x32xf32>
    %16 = arith.subf %0, %15 : vector<2x8x32xf32>
    %cst_12 = arith.constant 9.99999974E-6 : f32
    %17 = vector.broadcast %cst_12 : f32 to vector<2x8x1xf32>
    %18 = arith.addf %14, %17 : vector<2x8x1xf32>
    %19 = math.rsqrt %18 : vector<2x8x1xf32>
    %20 = vector.broadcast %19 : vector<2x8x1xf32> to vector<2x8x32xf32>
    %21 = arith.mulf %16, %20 : vector<2x8x32xf32>
    %22 = vector.shape_cast %2 : vector<1x32xf32> to vector<1x1x32xf32>
    %23 = vector.broadcast %22 : vector<1x1x32xf32> to vector<2x8x32xf32>
    %24 = arith.mulf %21, %23 : vector<2x8x32xf32>
    %25 = vector.shape_cast %3 : vector<1x32xf32> to vector<1x1x32xf32>
    %26 = vector.broadcast %25 : vector<1x1x32xf32> to vector<2x8x32xf32>
    %27 = arith.addf %24, %26 : vector<2x8x32xf32>
    %28 = vector.shape_cast %27 : vector<2x8x32xf32> to vector<16x32xf32>
    %c0_13 = arith.constant 0 : index
    %c0_14 = arith.constant 0 : index
    %29 = vector.load %arg4[%c0_13, %c0_14] : memref<32x96xf32, #tpu.memory_space<vmem>>, vector<32x96xf32>
    %cst_15 = arith.constant dense<0.000000e+00> : vector<16x96xf32>
    %30 = tpu.matmul %28, %29, %cst_15 {dimension_numbers = #tpu.dot_dimension_numbers<[1], [0], [0], [1], [0, 0, 1, 1], [], []>} : vector<16x32xf32>, vector<32x96xf32>, vector<16x96xf32> -> vector<16x96xf32>
    %c0_16 = arith.constant 0 : index
    %c0_17 = arith.constant 0 : index
    %31 = vector.load %arg5[%c0_16, %c0_17] : memref<1x96xf32, #tpu.memory_space<vmem>>, vector<1x96xf32>
    %32 = vector.broadcast %31 : vector<1x96xf32> to vector<16x96xf32>
    %33 = arith.addf %30, %32 : vector<16x96xf32>
    %34 = vector.shape_cast %33 : vector<16x96xf32> to vector<2x8x96xf32>
    %35 = vector.extract_strided_slice %34 {offsets = [0, 0, 0], sizes = [2, 8, 8], strides = [1, 1, 1]} : vector<2x8x96xf32> to vector<2x8x8xf32>
    %36 = vector.extract_strided_slice %34 {offsets = [0, 0, 32], sizes = [2, 8, 8], strides = [1, 1, 1]} : vector<2x8x96xf32> to vector<2x8x8xf32>
    %37 = vector.extract_strided_slice %34 {offsets = [0, 0, 64], sizes = [2, 8, 8], strides = [1, 1, 1]} : vector<2x8x96xf32> to vector<2x8x8xf32>
    "tpu.trace_start"() <{level = 10 : i32, message = "bqd,bkd->bqk"}> : () -> ()
    %cst_18 = arith.constant dense<0.000000e+00> : vector<2x8x8xf32>
    %38 = tpu.matmul %35, %36, %cst_18 {dimension_numbers = #tpu.dot_dimension_numbers<[2], [2], [1], [1], [0, 0, 0, 1, 1, 1], [0], [0]>} : vector<2x8x8xf32>, vector<2x8x8xf32>, vector<2x8x8xf32> -> vector<2x8x8xf32>
    "tpu.trace_stop"() : () -> ()
    %39 = vector.broadcast %1 : vector<2x1x8xf32> to vector<2x8x8xf32>
    %40 = arith.addf %38, %39 : vector<2x8x8xf32>
    %cst_19 = arith.constant dense<0xFF800000> : vector<2x8xf32>
    %41 = vector.multi_reduction <maximumf>, %40, %cst_19 [2] : vector<2x8x8xf32> to vector<2x8xf32>
    %42 = vector.shape_cast %41 : vector<2x8xf32> to vector<2x8x1xf32>
    %43 = vector.broadcast %42 : vector<2x8x1xf32> to vector<2x8x8xf32>
    %44 = arith.subf %40, %43 : vector<2x8x8xf32>
    %45 = math.exp %44 : vector<2x8x8xf32>
    %cst_20 = arith.constant dense<0.000000e+00> : vector<2x8xf32>
    %46 = vector.multi_reduction <add>, %45, %cst_20 [2] : vector<2x8x8xf32> to vector<2x8xf32>
    %47 = vector.shape_cast %46 : vector<2x8xf32> to vector<2x8x1xf32>
    "tpu.trace_start"() <{level = 10 : i32, message = "bqk,bkd->bqd"}> : () -> ()
    %cst_21 = arith.constant dense<0.000000e+00> : vector<2x8x8xf32>
    %48 = tpu.matmul %45, %37, %cst_21 {dimension_numbers = #tpu.dot_dimension_numbers<[2], [1], [1], [2], [0, 0, 0, 1, 1, 2], [0], [0]>} : vector<2x8x8xf32>, vector<2x8x8xf32>, vector<2x8x8xf32> -> vector<2x8x8xf32>
    "tpu.trace_stop"() : () -> ()
    %49 = vector.broadcast %47 : vector<2x8x1xf32> to vector<2x8x8xf32>
    %50 = arith.divf %48, %49 : vector<2x8x8xf32>
    %51 = vector.extract_strided_slice %34 {offsets = [0, 0, 8], sizes = [2, 8, 8], strides = [1, 1, 1]} : vector<2x8x96xf32> to vector<2x8x8xf32>
    %52 = vector.extract_strided_slice %34 {offsets = [0, 0, 40], sizes = [2, 8, 8], strides = [1, 1, 1]} : vector<2x8x96xf32> to vector<2x8x8xf32>
    %53 = vector.extract_strided_slice %34 {offsets = [0, 0, 72], sizes = [2, 8, 8], strides = [1, 1, 1]} : vector<2x8x96xf32> to vector<2x8x8xf32>
    "tpu.trace_start"() <{level = 10 : i32, message = "bqd,bkd->bqk"}> : () -> ()
    %cst_22 = arith.constant dense<0.000000e+00> : vector<2x8x8xf32>
    %54 = tpu.matmul %51, %52, %cst_22 {dimension_numbers = #tpu.dot_dimension_numbers<[2], [2], [1], [1], [0, 0, 0, 1, 1, 1], [0], [0]>} : vector<2x8x8xf32>, vector<2x8x8xf32>, vector<2x8x8xf32> -> vector<2x8x8xf32>
    "tpu.trace_stop"() : () -> ()
    %55 = vector.broadcast %1 : vector<2x1x8xf32> to vector<2x8x8xf32>
    %56 = arith.addf %54, %55 : vector<2x8x8xf32>
    %cst_23 = arith.constant dense<0xFF800000> : vector<2x8xf32>
    %57 = vector.multi_reduction <maximumf>, %56, %cst_23 [2] : vector<2x8x8xf32> to vector<2x8xf32>
    %58 = vector.shape_cast %57 : vector<2x8xf32> to vector<2x8x1xf32>
    %59 = vector.broadcast %58 : vector<2x8x1xf32> to vector<2x8x8xf32>
    %60 = arith.subf %56, %59 : vector<2x8x8xf32>
    %61 = math.exp %60 : vector<2x8x8xf32>
    %cst_24 = arith.constant dense<0.000000e+00> : vector<2x8xf32>
    %62 = vector.multi_reduction <add>, %61, %cst_24 [2] : vector<2x8x8xf32> to vector<2x8xf32>
    %63 = vector.shape_cast %62 : vector<2x8xf32> to vector<2x8x1xf32>
    "tpu.trace_start"() <{level = 10 : i32, message = "bqk,bkd->bqd"}> : () -> ()
    %cst_25 = arith.constant dense<0.000000e+00> : vector<2x8x8xf32>
    %64 = tpu.matmul %61, %53, %cst_25 {dimension_numbers = #tpu.dot_dimension_numbers<[2], [1], [1], [2], [0, 0, 0, 1, 1, 2], [0], [0]>} : vector<2x8x8xf32>, vector<2x8x8xf32>, vector<2x8x8xf32> -> vector<2x8x8xf32>
    "tpu.trace_stop"() : () -> ()
    %65 = vector.broadcast %63 : vector<2x8x1xf32> to vector<2x8x8xf32>
    %66 = arith.divf %64, %65 : vector<2x8x8xf32>
    %67 = vector.extract_strided_slice %34 {offsets = [0, 0, 16], sizes = [2, 8, 8], strides = [1, 1, 1]} : vector<2x8x96xf32> to vector<2x8x8xf32>
    %68 = vector.extract_strided_slice %34 {offsets = [0, 0, 48], sizes = [2, 8, 8], strides = [1, 1, 1]} : vector<2x8x96xf32> to vector<2x8x8xf32>
    %69 = vector.extract_strided_slice %34 {offsets = [0, 0, 80], sizes = [2, 8, 8], strides = [1, 1, 1]} : vector<2x8x96xf32> to vector<2x8x8xf32>
    "tpu.trace_start"() <{level = 10 : i32, message = "bqd,bkd->bqk"}> : () -> ()
    %cst_26 = arith.constant dense<0.000000e+00> : vector<2x8x8xf32>
    %70 = tpu.matmul %67, %68, %cst_26 {dimension_numbers = #tpu.dot_dimension_numbers<[2], [2], [1], [1], [0, 0, 0, 1, 1, 1], [0], [0]>} : vector<2x8x8xf32>, vector<2x8x8xf32>, vector<2x8x8xf32> -> vector<2x8x8xf32>
    "tpu.trace_stop"() : () -> ()
    %71 = vector.broadcast %1 : vector<2x1x8xf32> to vector<2x8x8xf32>
    %72 = arith.addf %70, %71 : vector<2x8x8xf32>
    %cst_27 = arith.constant dense<0xFF800000> : vector<2x8xf32>
    %73 = vector.multi_reduction <maximumf>, %72, %cst_27 [2] : vector<2x8x8xf32> to vector<2x8xf32>
    %74 = vector.shape_cast %73 : vector<2x8xf32> to vector<2x8x1xf32>
    %75 = vector.broadcast %74 : vector<2x8x1xf32> to vector<2x8x8xf32>
    %76 = arith.subf %72, %75 : vector<2x8x8xf32>
    %77 = math.exp %76 : vector<2x8x8xf32>
    %cst_28 = arith.constant dense<0.000000e+00> : vector<2x8xf32>
    %78 = vector.multi_reduction <add>, %77, %cst_28 [2] : vector<2x8x8xf32> to vector<2x8xf32>
    %79 = vector.shape_cast %78 : vector<2x8xf32> to vector<2x8x1xf32>
    "tpu.trace_start"() <{level = 10 : i32, message = "bqk,bkd->bqd"}> : () -> ()
    %cst_29 = arith.constant dense<0.000000e+00> : vector<2x8x8xf32>
    %80 = tpu.matmul %77, %69, %cst_29 {dimension_numbers = #tpu.dot_dimension_numbers<[2], [1], [1], [2], [0, 0, 0, 1, 1, 2], [0], [0]>} : vector<2x8x8xf32>, vector<2x8x8xf32>, vector<2x8x8xf32> -> vector<2x8x8xf32>
    "tpu.trace_stop"() : () -> ()
    %81 = vector.broadcast %79 : vector<2x8x1xf32> to vector<2x8x8xf32>
    %82 = arith.divf %80, %81 : vector<2x8x8xf32>
    %83 = vector.extract_strided_slice %34 {offsets = [0, 0, 24], sizes = [2, 8, 8], strides = [1, 1, 1]} : vector<2x8x96xf32> to vector<2x8x8xf32>
    %84 = vector.extract_strided_slice %34 {offsets = [0, 0, 56], sizes = [2, 8, 8], strides = [1, 1, 1]} : vector<2x8x96xf32> to vector<2x8x8xf32>
    %85 = vector.extract_strided_slice %34 {offsets = [0, 0, 88], sizes = [2, 8, 8], strides = [1, 1, 1]} : vector<2x8x96xf32> to vector<2x8x8xf32>
    "tpu.trace_start"() <{level = 10 : i32, message = "bqd,bkd->bqk"}> : () -> ()
    %cst_30 = arith.constant dense<0.000000e+00> : vector<2x8x8xf32>
    %86 = tpu.matmul %83, %84, %cst_30 {dimension_numbers = #tpu.dot_dimension_numbers<[2], [2], [1], [1], [0, 0, 0, 1, 1, 1], [0], [0]>} : vector<2x8x8xf32>, vector<2x8x8xf32>, vector<2x8x8xf32> -> vector<2x8x8xf32>
    "tpu.trace_stop"() : () -> ()
    %87 = vector.broadcast %1 : vector<2x1x8xf32> to vector<2x8x8xf32>
    %88 = arith.addf %86, %87 : vector<2x8x8xf32>
    %cst_31 = arith.constant dense<0xFF800000> : vector<2x8xf32>
    %89 = vector.multi_reduction <maximumf>, %88, %cst_31 [2] : vector<2x8x8xf32> to vector<2x8xf32>
    %90 = vector.shape_cast %89 : vector<2x8xf32> to vector<2x8x1xf32>
    %91 = vector.broadcast %90 : vector<2x8x1xf32> to vector<2x8x8xf32>
    %92 = arith.subf %88, %91 : vector<2x8x8xf32>
    %93 = math.exp %92 : vector<2x8x8xf32>
    %cst_32 = arith.constant dense<0.000000e+00> : vector<2x8xf32>
    %94 = vector.multi_reduction <add>, %93, %cst_32 [2] : vector<2x8x8xf32> to vector<2x8xf32>
    %95 = vector.shape_cast %94 : vector<2x8xf32> to vector<2x8x1xf32>
    "tpu.trace_start"() <{level = 10 : i32, message = "bqk,bkd->bqd"}> : () -> ()
    %cst_33 = arith.constant dense<0.000000e+00> : vector<2x8x8xf32>
    %96 = tpu.matmul %93, %85, %cst_33 {dimension_numbers = #tpu.dot_dimension_numbers<[2], [1], [1], [2], [0, 0, 0, 1, 1, 2], [0], [0]>} : vector<2x8x8xf32>, vector<2x8x8xf32>, vector<2x8x8xf32> -> vector<2x8x8xf32>
    "tpu.trace_stop"() : () -> ()
    %97 = vector.broadcast %95 : vector<2x8x1xf32> to vector<2x8x8xf32>
    %98 = arith.divf %96, %97 : vector<2x8x8xf32>
    %99 = tpu.concatenate %50, %66, %82, %98 in 2 : vector<2x8x8xf32>, vector<2x8x8xf32>, vector<2x8x8xf32>, vector<2x8x8xf32> -> vector<2x8x32xf32>
    %100 = vector.shape_cast %99 : vector<2x8x32xf32> to vector<16x32xf32>
    %c0_34 = arith.constant 0 : index
    %c0_35 = arith.constant 0 : index
    %101 = vector.load %arg6[%c0_34, %c0_35] : memref<32x32xf32, #tpu.memory_space<vmem>>, vector<32x32xf32>
    %cst_36 = arith.constant dense<0.000000e+00> : vector<16x32xf32>
    %102 = tpu.matmul %100, %101, %cst_36 {dimension_numbers = #tpu.dot_dimension_numbers<[1], [0], [0], [1], [0, 0, 1, 1], [], []>} : vector<16x32xf32>, vector<32x32xf32>, vector<16x32xf32> -> vector<16x32xf32>
    %c0_37 = arith.constant 0 : index
    %c0_38 = arith.constant 0 : index
    %103 = vector.load %arg7[%c0_37, %c0_38] : memref<1x32xf32, #tpu.memory_space<vmem>>, vector<1x32xf32>
    %104 = vector.broadcast %103 : vector<1x32xf32> to vector<16x32xf32>
    %105 = arith.addf %102, %104 : vector<16x32xf32>
    %106 = vector.shape_cast %105 : vector<16x32xf32> to vector<2x8x32xf32>
    %107 = arith.addf %0, %106 : vector<2x8x32xf32>
    %c0_39 = arith.constant 0 : index
    %c0_40 = arith.constant 0 : index
    %108 = vector.load %arg8[%c0_39, %c0_40] : memref<1x32xf32, #tpu.memory_space<vmem>>, vector<1x32xf32>
    %c0_41 = arith.constant 0 : index
    %c0_42 = arith.constant 0 : index
    %109 = vector.load %arg9[%c0_41, %c0_42] : memref<1x32xf32, #tpu.memory_space<vmem>>, vector<1x32xf32>
    %cst_43 = arith.constant dense<0.000000e+00> : vector<2x8xf32>
    %110 = vector.multi_reduction <add>, %107, %cst_43 [2] : vector<2x8x32xf32> to vector<2x8xf32>
    %111 = vector.shape_cast %110 : vector<2x8xf32> to vector<2x8x1xf32>
    %cst_44 = arith.constant 3.200000e+01 : f32
    %112 = vector.broadcast %cst_44 : f32 to vector<2x8x1xf32>
    %113 = arith.divf %111, %112 : vector<2x8x1xf32>
    %114 = vector.broadcast %113 : vector<2x8x1xf32> to vector<2x8x32xf32>
    %115 = arith.subf %107, %114 : vector<2x8x32xf32>
    %116 = arith.mulf %115, %115 : vector<2x8x32xf32>
    %cst_45 = arith.constant dense<0.000000e+00> : vector<2x8xf32>
    %117 = vector.multi_reduction <add>, %116, %cst_45 [2] : vector<2x8x32xf32> to vector<2x8xf32>
    %118 = vector.shape_cast %117 : vector<2x8xf32> to vector<2x8x1xf32>
    %cst_46 = arith.constant 3.200000e+01 : f32
    %119 = vector.broadcast %cst_46 : f32 to vector<2x8x1xf32>
    %120 = arith.divf %118, %119 : vector<2x8x1xf32>
    %121 = vector.broadcast %113 : vector<2x8x1xf32> to vector<2x8x32xf32>
    %122 = arith.subf %107, %121 : vector<2x8x32xf32>
    %cst_47 = arith.constant 9.99999974E-6 : f32
    %123 = vector.broadcast %cst_47 : f32 to vector<2x8x1xf32>
    %124 = arith.addf %120, %123 : vector<2x8x1xf32>
    %125 = math.rsqrt %124 : vector<2x8x1xf32>
    %126 = vector.broadcast %125 : vector<2x8x1xf32> to vector<2x8x32xf32>
    %127 = arith.mulf %122, %126 : vector<2x8x32xf32>
    %128 = vector.shape_cast %108 : vector<1x32xf32> to vector<1x1x32xf32>
    %129 = vector.broadcast %128 : vector<1x1x32xf32> to vector<2x8x32xf32>
    %130 = arith.mulf %127, %129 : vector<2x8x32xf32>
    %131 = vector.shape_cast %109 : vector<1x32xf32> to vector<1x1x32xf32>
    %132 = vector.broadcast %131 : vector<1x1x32xf32> to vector<2x8x32xf32>
    %133 = arith.addf %130, %132 : vector<2x8x32xf32>
    %134 = vector.shape_cast %133 : vector<2x8x32xf32> to vector<16x32xf32>
    %c0_48 = arith.constant 0 : index
    %c0_49 = arith.constant 0 : index
    %135 = vector.load %arg10[%c0_48, %c0_49] : memref<32x128xf32, #tpu.memory_space<vmem>>, vector<32x128xf32>
    %cst_50 = arith.constant dense<0.000000e+00> : vector<16x128xf32>
    %136 = tpu.matmul %134, %135, %cst_50 {dimension_numbers = #tpu.dot_dimension_numbers<[1], [0], [0], [1], [0, 0, 1, 1], [], []>} : vector<16x32xf32>, vector<32x128xf32>, vector<16x128xf32> -> vector<16x128xf32>
    %c0_51 = arith.constant 0 : index
    %c0_52 = arith.constant 0 : index
    %137 = vector.load %arg11[%c0_51, %c0_52] : memref<1x128xf32, #tpu.memory_space<vmem>>, vector<1x128xf32>
    %138 = vector.broadcast %137 : vector<1x128xf32> to vector<16x128xf32>
    %139 = arith.addf %136, %138 : vector<16x128xf32>
    %cst_53 = arith.constant 5.000000e-01 : f32
    %140 = vector.broadcast %cst_53 : f32 to vector<16x128xf32>
    %141 = arith.mulf %140, %139 : vector<16x128xf32>
    %cst_54 = arith.constant 4.471500e-02 : f32
    %142 = vector.broadcast %cst_54 : f32 to vector<16x128xf32>
    %143 = arith.mulf %142, %139 : vector<16x128xf32>
    %144 = arith.mulf %143, %139 : vector<16x128xf32>
    %145 = arith.mulf %144, %139 : vector<16x128xf32>
    %146 = arith.addf %139, %145 : vector<16x128xf32>
    %cst_55 = arith.constant 0.797884583 : f32
    %147 = vector.broadcast %cst_55 : f32 to vector<16x128xf32>
    %148 = arith.mulf %147, %146 : vector<16x128xf32>
    %149 = math.tanh %148 : vector<16x128xf32>
    %cst_56 = arith.constant 1.000000e+00 : f32
    %150 = vector.broadcast %cst_56 : f32 to vector<16x128xf32>
    %151 = arith.addf %150, %149 : vector<16x128xf32>
    %152 = arith.mulf %141, %151 : vector<16x128xf32>
    %c0_57 = arith.constant 0 : index
    %c0_58 = arith.constant 0 : index
    %153 = vector.load %arg12[%c0_57, %c0_58] : memref<128x32xf32, #tpu.memory_space<vmem>>, vector<128x32xf32>
    %cst_59 = arith.constant dense<0.000000e+00> : vector<16x32xf32>
    %154 = tpu.matmul %152, %153, %cst_59 {dimension_numbers = #tpu.dot_dimension_numbers<[1], [0], [0], [1], [0, 0, 1, 1], [], []>} : vector<16x128xf32>, vector<128x32xf32>, vector<16x32xf32> -> vector<16x32xf32>
    %c0_60 = arith.constant 0 : index
    %c0_61 = arith.constant 0 : index
    %155 = vector.load %arg13[%c0_60, %c0_61] : memref<1x32xf32, #tpu.memory_space<vmem>>, vector<1x32xf32>
    %156 = vector.broadcast %155 : vector<1x32xf32> to vector<16x32xf32>
    %157 = arith.addf %154, %156 : vector<16x32xf32>
    %158 = vector.shape_cast %157 : vector<16x32xf32> to vector<2x8x32xf32>
    %159 = arith.addf %107, %158 : vector<2x8x32xf32>
    %c0_62 = arith.constant 0 : index
    %c0_63 = arith.constant 0 : index
    %c0_64 = arith.constant 0 : index
    %160 = vector.load %arg14[%c0_62, %c0_63, %c0_64] : memref<2x8x32xf32, #tpu.memory_space<vmem>>, vector<2x8x32xf32>
    tpu.vector_store %arg14[%c0_62, %c0_63, %c0_64], %159 {strides = array<i32>} : memref<2x8x32xf32, #tpu.memory_space<vmem>>, vector<2x8x32xf32>,
    return
  }
}

</mosaic_0001>

<llo_original>
// kernel: tpu_custom_call.1
$region0: #{tpu_custom_call.1}
  #allocation0 [shape = 'u32[]', space=smem, size = 0x4, offset = 0x4, fixed_abs, tag = 'smem constant byte address 0x4 - core index']
  #allocation1 [shape = 'u32[72,128]{1,0:T(1,128)}', space=vmem, size = 0x9000, scoped, tag = 'internal scratch']
  %s0 = inlined_call_operand.vmem [shape: f32[2,8,32], index: 0, kind: input, shape index: {}]
  %s1 = inlined_call_operand.vmem [shape: f32[2,1,8], index: 1, kind: input, shape index: {}]
  %s2 = inlined_call_operand.vmem [shape: f32[1,32], index: 2, kind: input, shape index: {}]
  %s3 = inlined_call_operand.vmem [shape: f32[1,32], index: 3, kind: input, shape index: {}]
  %s4 = inlined_call_operand.vmem [shape: f32[32,96], index: 4, kind: input, shape index: {}]
  %s5 = inlined_call_operand.vmem [shape: f32[1,96], index: 5, kind: input, shape index: {}]
  %s6 = inlined_call_operand.vmem [shape: f32[32,32], index: 6, kind: input, shape index: {}]
  %s7 = inlined_call_operand.vmem [shape: f32[1,32], index: 7, kind: input, shape index: {}]
  %s8 = inlined_call_operand.vmem [shape: f32[1,32], index: 8, kind: input, shape index: {}]
  %s9 = inlined_call_operand.vmem [shape: f32[1,32], index: 9, kind: input, shape index: {}]
  %s10 = inlined_call_operand.vmem [shape: f32[32,128], index: 10, kind: input, shape index: {}]
  %s11 = inlined_call_operand.vmem [shape: f32[1,128], index: 11, kind: input, shape index: {}]
  %s12 = inlined_call_operand.vmem [shape: f32[128,32], index: 12, kind: input, shape index: {}]
  %s13 = inlined_call_operand.vmem [shape: f32[1,32], index: 13, kind: input, shape index: {}]
  %s14 = inlined_call_operand.hbm [shape: f32[2,8,32], index: 14, kind: output, shape index: {}]
  %s15 = sld [smem:[#allocation0]]
  $region66: #{tpu_custom_call.1} parent=0
    _
  %s17 = ssub.s32 1, %s15
  %s18 = scalar_select 0, %s17, %s15
  $region1: #{tpu_custom_call.1} parent=0
    #allocation2 [shape = 'u8[8192]{0}', space=vmem, size = 0x2000, scoped, tag = 'output window, operand 0, single buffered']
    #allocation3 [shape = 's32[1]{0}', space=sflag, size = 0x4, scoped, tag = 'scoped memory for tpu_custom_call.1']
    %19 = vsyncpa [#allocation3], 0
    // Predicated region
    $region2: #{tpu_custom_call.1} parent=1 // pred_check
      _
    $region3: #{tpu_custom_call.1} parent=1 // pred_check_branch
      %21 = sbr.rel (0) target = $region5
    $region4: #{tpu_custom_call.1} parent=1 // pred_region
      _
    $region5: #{tpu_custom_call.1} parent=1 // pred_fallthru
      _
    // Predicated region
    $region6: #{tpu_custom_call.1} parent=1 // pred_check
      _
    $region7: #{tpu_custom_call.1} parent=1 // pred_check_branch
      %23 = sbr.rel (0) target = $region9
    $region8: #{tpu_custom_call.1} parent=1 // pred_region
      _
    $region9: #{tpu_custom_call.1} parent=1 // pred_fallthru
      _
    // Predicated region
    $region10: #{tpu_custom_call.1} parent=1 // pred_check
      _
    $region11: #{tpu_custom_call.1} parent=1 // pred_check_branch
      %25 = sbr.rel (0) target = $region13
    $region12: #{tpu_custom_call.1} parent=1 // pred_region
      _
    $region13: #{tpu_custom_call.1} parent=1 // pred_fallthru
      _
    // Predicated region
    $region14: #{tpu_custom_call.1} parent=1 // pred_check
      _
    $region15: #{tpu_custom_call.1} parent=1 // pred_check_branch
      %27 = sbr.rel (0) target = $region17
    $region16: #{tpu_custom_call.1} parent=1 // pred_region
      _
    $region17: #{tpu_custom_call.1} parent=1 // pred_fallthru
      _
    // Predicated region
    $region18: #{tpu_custom_call.1} parent=1 // pred_check
      _
    $region19: #{tpu_custom_call.1} parent=1 // pred_check_branch
      %29 = sbr.rel (0) target = $region21
    $region20: #{tpu_custom_call.1} parent=1 // pred_region
      _
    $region21: #{tpu_custom_call.1} parent=1 // pred_fallthru
      _
    // Predicated region
    $region22: #{tpu_custom_call.1} parent=1 // pred_check
      _
    $region23: #{tpu_custom_call.1} parent=1 // pred_check_branch
      %31 = sbr.rel (0) target = $region25
    $region24: #{tpu_custom_call.1} parent=1 // pred_region
      _
    $region25: #{tpu_custom_call.1} parent=1 // pred_fallthru
      _
    // Predicated region
    $region26: #{tpu_custom_call.1} parent=1 // pred_check
      _
    $region27: #{tpu_custom_call.1} parent=1 // pred_check_branch
      %33 = sbr.rel (0) target = $region29
    $region28: #{tpu_custom_call.1} parent=1 // pred_region
      _
    $region29: #{tpu_custom_call.1} parent=1 // pred_fallthru
      _
    // Predicated region
    $region30: #{tpu_custom_call.1} parent=1 // pred_check
      _
    $region31: #{tpu_custom_call.1} parent=1 // pred_check_branch
      %35 = sbr.rel (0) target = $region33
    $region32: #{tpu_custom_call.1} parent=1 // pred_region
      _
    $region33: #{tpu_custom_call.1} parent=1 // pred_fallthru
      _
    // Predicated region
    $region34: #{tpu_custom_call.1} parent=1 // pred_check
      _
    $region35: #{tpu_custom_call.1} parent=1 // pred_check_branch
      %37 = sbr.rel (0) target = $region37
    $region36: #{tpu_custom_call.1} parent=1 // pred_region
      _
    $region37: #{tpu_custom_call.1} parent=1 // pred_fallthru
      _
    // Predicated region
    $region38: #{tpu_custom_call.1} parent=1 // pred_check
      _
    $region39: #{tpu_custom_call.1} parent=1 // pred_check_branch
      %39 = sbr.rel (0) target = $region41
    $region40: #{tpu_custom_call.1} parent=1 // pred_region
      _
    $region41: #{tpu_custom_call.1} parent=1 // pred_fallthru
      _
    // Predicated region
    $region42: #{tpu_custom_call.1} parent=1 // pred_check
      _
    $region43: #{tpu_custom_call.1} parent=1 // pred_check_branch
      %41 = sbr.rel (0) target = $region45
    $region44: #{tpu_custom_call.1} parent=1 // pred_region
      _
    $region45: #{tpu_custom_call.1} parent=1 // pred_fallthru
      _
    // Predicated region
    $region46: #{tpu_custom_call.1} parent=1 // pred_check
      _
    $region47: #{tpu_custom_call.1} parent=1 // pred_check_branch
      %43 = sbr.rel (0) target = $region49
    $region48: #{tpu_custom_call.1} parent=1 // pred_region
      _
    $region49: #{tpu_custom_call.1} parent=1 // pred_fallthru
      _
    // Predicated region
    $region50: #{tpu_custom_call.1} parent=1 // pred_check
      _
    $region51: #{tpu_custom_call.1} parent=1 // pred_check_branch
      %45 = sbr.rel (0) target = $region53
    $region52: #{tpu_custom_call.1} parent=1 // pred_region
      _
    $region53: #{tpu_custom_call.1} parent=1 // pred_fallthru
      _
    // Predicated region
    $region54: #{tpu_custom_call.1} parent=1 // pred_check
      _
    $region55: #{tpu_custom_call.1} parent=1 // pred_check_branch
      %47 = sbr.rel (0) target = $region57
    $region56: #{tpu_custom_call.1} parent=1 // pred_region
      _
    $region57: #{tpu_custom_call.1} parent=1 // pred_fallthru
      _
    %v48 = vld [vmem:[%s0] sm:$0xff]
    %v49 = vld [vmem:[%s0 + $0x8] sm:$0xff]
    %v50 = vld [vmem:[%s1] sm:$0x1]
    %v51 = vld [vmem:[%s1 + $0x1] sm:$0x1]
    %v52 = vld [vmem:[%s2] sm:$0x1]
    %v53 = vld [vmem:[%s3] sm:$0x1]
    %vm54 = vcmask 261120
    %v55 = vsel %vm54, %v48, 0.0
    %56 = vadd.xlane.f32.xlu0 %v55
    %v57 = vpop.xlane.xlu0 %56
    %v58 = vsel %vm54, %v49, 0.0
    %59 = vadd.xlane.f32.xlu0 %v58
    %v60 = vpop.xlane.xlu0 %59
    %v61 = vrcp.pop 32.0
    %v62 = vmul.f32 32.0, %v61
    %v63 = vsub.f32 1.0, %v62
    %v64 = vmul.f32 %v61, %v63
    %v65 = vadd.f32 %v61, %v64
    %vm66 = vweird.f32 %v61
    %v67 = vsel %vm66, %v61, %v65
    %v68 = vmul.f32 %v57, %v67
    %v69 = vmul.f32 %v60, %v67
    %v70 = vsub.f32 %v48, %v68
    %v71 = vsub.f32 %v49, %v69
    %v72 = vmul.f32 %v70, %v70
    %v73 = vmul.f32 %v71, %v71
    %v74 = vsel %vm54, %v72, 0.0
    %75 = vadd.xlane.f32.xlu0 %v74
    %v76 = vpop.xlane.xlu0 %75
    %v77 = vsel %vm54, %v73, 0.0
    %78 = vadd.xlane.f32.xlu0 %v77
    %v79 = vpop.xlane.xlu0 %78
    %v80 = vmul.f32 %v76, %v67
    %v81 = vmul.f32 %v79, %v67
    %v82 = vadd.f32 %v80, 1e-05
    %v83 = vadd.f32 %v81, 1e-05
    %v84 = vrsqrt.pop %v82
    %v85 = vmul.f32 %v84, %v82
    %v86 = vmul.f32 %v85, %v84
    %v87 = vmul.f32 0.5, %v86
    %v88 = vsub.f32 1.5, %v87
    %v89 = vmul.f32 %v84, %v88
    %vm90 = vweird.f32 %v82
    %vm91 = vweird.f32 %v84
    %vm92 = vmor %vm90, %vm91
    %v93 = vsel %vm92, %v84, %v89
    %v94 = vrsqrt.pop %v83
    %v95 = vmul.f32 %v94, %v83
    %v96 = vmul.f32 %v95, %v94
    %v97 = vmul.f32 0.5, %v96
    %v98 = vsub.f32 1.5, %v97
    %v99 = vmul.f32 %v94, %v98
    %vm100 = vweird.f32 %v83
    %vm101 = vweird.f32 %v94
    %vm102 = vmor %vm100, %vm101
    %v103 = vsel %vm102, %v94, %v99
    %v104 = vmul.f32 %v70, %v93
    %v105 = vmul.f32 %v71, %v103
    %v107 = vperm.slane %v52, 0
    %v109 = vmul.f32 %v104, %v107
    %v110 = vmul.f32 %v105, %v107
    %v112 = vperm.slane %v53, 0
    %v114 = vadd.f32 %v109, %v112
    %v115 = vadd.f32 %v110, %v112
    %v116 = vld [vmem:[%s4] sm:$0xff]
    %v117 = vld [vmem:[%s4 + $0x8] sm:$0xff]
    %v118 = vld [vmem:[%s4 + $0x10] sm:$0xff]
    %v119 = vld [vmem:[%s4 + $0x18] sm:$0xff]
    %v120 = vld [vmem:[%s5] sm:$0x1]
    %v122 = vperm.slane %v120, 0
    %v125 = vsel %vm54, %v114, 0
    %v128 = vsel %vm54, %v115, 0
    %130 = vmatpush.msra.mxu0 0.0
    %131 = vmatpush.msra.mxu0 0.0
    %132 = vmatpush.msra.mxu0 0.0
    %133 = vmatpush.msra.mxu0 0.0
    %134 = vmatpush.msra.mxu0 0.0
    %135 = vmatpush.msra.mxu0 0.0
    %136 = vmatpush.msra.mxu0 0.0
    %137 = vmatpush.msra.mxu0 0.0
    %138 = vmatpush.msra.mxu0 0.0
    %139 = vmatpush.msra.mxu0 0.0
    %140 = vmatpush.msra.mxu0 0.0
    %141 = vmatpush.msra.mxu0 0.0
    %142 = vmatpush.msra.mxu0 %v119
    %143 = vmatpush.msra.mxu0 %v118
    %144 = vmatpush.msra.mxu0 %v117
    %145 = vmatpush.msra.mxu0 %v116
    %146 = vmatmul.f32.gmra.mxu0 %v125
    %v147 = vpop.f32.mrf.mxu0
    %v148 = vadd.f32 %v122, %v147
    %149 = vmatmul.f32.gmra.mxu0 %v128
    %v150 = vpop.f32.mrf.mxu0
    %v151 = vadd.f32 %v122, %v150
    %152 = vdwg.mxu0
    %v155 = vperm.slane %v50, 0
    %v156 = vperm.slane %v51, 0
    %160 = vrot.lane.b32.xlu0 %v148, 96
    %v161 = vpop.permute.xlu0 %160
    %vm162 = vcmask 64512
    %v163 = vsel %vm162, %v148, 0
    %v165 = vsel %vm162, %v161, 0
    %167 = vmatpush.xpose.msra.mxu0 0.0
    %168 = vmatpush.xpose.msra.mxu0 0.0
    %169 = vmatpush.xpose.msra.mxu0 0.0
    %170 = vmatpush.xpose.msra.mxu0 0.0
    %171 = vmatpush.xpose.msra.mxu0 0.0
    %172 = vmatpush.xpose.msra.mxu0 0.0
    %173 = vmatpush.xpose.msra.mxu0 0.0
    %174 = vmatpush.xpose.msra.mxu0 0.0
    %175 = vmatpush.xpose.msra.mxu0 0.0
    %176 = vmatpush.xpose.msra.mxu0 0.0
    %177 = vmatpush.xpose.msra.mxu0 0.0
    %178 = vmatpush.xpose.msra.mxu0 0.0
    %179 = vmatpush.xpose.msra.mxu0 0.0
    %180 = vmatpush.xpose.msra.mxu0 0.0
    %181 = vmatpush.xpose.msra.mxu0 0.0
    %182 = vmatpush.xpose.msra.mxu0 %v165
    %183 = vmatmul.f32.gmra.mxu0 %v163
    %v184 = vpop.f32.mrf.mxu0
    %v185 = vadd.f32 %v155, %v184
    %186 = vdwg.mxu0
    %188 = vrot.lane.b32.xlu0 %v151, 96
    %v189 = vpop.permute.xlu0 %188
    %v190 = vsel %vm162, %v151, 0
    %v192 = vsel %vm162, %v189, 0
    %194 = vmatpush.xpose.msra.mxu0 0.0
    %195 = vmatpush.xpose.msra.mxu0 0.0
    %196 = vmatpush.xpose.msra.mxu0 0.0
    %197 = vmatpush.xpose.msra.mxu0 0.0
    %198 = vmatpush.xpose.msra.mxu0 0.0
    %199 = vmatpush.xpose.msra.mxu0 0.0
    %200 = vmatpush.xpose.msra.mxu0 0.0
    %201 = vmatpush.xpose.msra.mxu0 0.0
    %202 = vmatpush.xpose.msra.mxu0 0.0
    %203 = vmatpush.xpose.msra.mxu0 0.0
    %204 = vmatpush.xpose.msra.mxu0 0.0
    %205 = vmatpush.xpose.msra.mxu0 0.0
    %206 = vmatpush.xpose.msra.mxu0 0.0
    %207 = vmatpush.xpose.msra.mxu0 0.0
    %208 = vmatpush.xpose.msra.mxu0 0.0
    %209 = vmatpush.xpose.msra.mxu0 %v192
    %210 = vmatmul.f32.gmra.mxu0 %v190
    %v211 = vpop.f32.mrf.mxu0
    %v212 = vadd.f32 %v156, %v211
    %213 = vdwg.mxu0
    %v214 = vsel %vm162, %v185, -inf
    %215 = vmax.xlane.f32.xlu0 %v214
    %v216 = vpop.xlane.xlu0 %215
    %v217 = vsel %vm162, %v212, -inf
    %218 = vmax.xlane.f32.xlu0 %v217
    %v219 = vpop.xlane.xlu0 %218
    %v220 = vsub.f32 %v185, %v216
    %v221 = vsub.f32 %v212, %v219
    %v222 = vmul.f32 %v220, 1.442695
    %v223 = vpow.pop %v222
    %v224 = vmul.f32 %v221, 1.442695
    %v225 = vpow.pop %v224
    %v226 = vsel %vm162, %v223, 0.0
    %227 = vadd.xlane.f32.xlu0 %v226
    %v228 = vpop.xlane.xlu0 %227
    %v229 = vsel %vm162, %v225, 0.0
    %230 = vadd.xlane.f32.xlu0 %v229
    %v231 = vpop.xlane.xlu0 %230
    %232 = vrot.lane.b32.xlu0 %v148, 64
    %v233 = vpop.permute.xlu0 %232
    %v236 = vsel %vm162, %v223, 0
    %238 = vmatpush.msra.mxu0 0.0
    %239 = vmatpush.msra.mxu0 0.0
    %240 = vmatpush.msra.mxu0 0.0
    %241 = vmatpush.msra.mxu0 0.0
    %242 = vmatpush.msra.mxu0 0.0
    %243 = vmatpush.msra.mxu0 0.0
    %244 = vmatpush.msra.mxu0 0.0
    %245 = vmatpush.msra.mxu0 0.0
    %246 = vmatpush.msra.mxu0 0.0
    %247 = vmatpush.msra.mxu0 0.0
    %248 = vmatpush.msra.mxu0 0.0
    %249 = vmatpush.msra.mxu0 0.0
    %250 = vmatpush.msra.mxu0 0.0
    %251 = vmatpush.msra.mxu0 0.0
    %252 = vmatpush.msra.mxu0 0.0
    %253 = vmatpush.msra.mxu0 %v233
    %254 = vmatmul.f32.gmra.mxu0 %v236
    %v255 = vpop.f32.mrf.mxu0
    %v256 = vadd.f32 0.0, %v255
    %257 = vdwg.mxu0
    %258 = vrot.lane.b32.xlu0 %v151, 64
    %v259 = vpop.permute.xlu0 %258
    %v262 = vsel %vm162, %v225, 0
    %264 = vmatpush.msra.mxu0 0.0
    %265 = vmatpush.msra.mxu0 0.0
    %266 = vmatpush.msra.mxu0 0.0
    %267 = vmatpush.msra.mxu0 0.0
    %268 = vmatpush.msra.mxu0 0.0
    %269 = vmatpush.msra.mxu0 0.0
    %270 = vmatpush.msra.mxu0 0.0
    %271 = vmatpush.msra.mxu0 0.0
    %272 = vmatpush.msra.mxu0 0.0
    %273 = vmatpush.msra.mxu0 0.0
    %274 = vmatpush.msra.mxu0 0.0
    %275 = vmatpush.msra.mxu0 0.0
    %276 = vmatpush.msra.mxu0 0.0
    %277 = vmatpush.msra.mxu0 0.0
    %278 = vmatpush.msra.mxu0 0.0
    %279 = vmatpush.msra.mxu0 %v259
    %280 = vmatmul.f32.gmra.mxu0 %v262
    %v281 = vpop.f32.mrf.mxu0
    %v282 = vadd.f32 0.0, %v281
    %283 = vdwg.mxu0
    %v284 = vrcp.pop %v228
    %v285 = vmul.f32 %v228, %v284
    %v286 = vsub.f32 1.0, %v285
    %v287 = vmul.f32 %v284, %v286
    %v288 = vadd.f32 %v284, %v287
    %vm289 = vweird.f32 %v228
    %vm290 = vweird.f32 %v284
    %vm291 = vmor %vm289, %vm290
    %v292 = vsel %vm291, %v284, %v288
    %v293 = vand.u32 2147483647, %v228
    %vm294 = vcmp.eq.f32.partialorder %v293, 8.507059e+37
    %v295 = vand.u32 %v228, 2147483648
    %v296 = vor.u32 1.1754944e-38, %v295
    %v297 = vsel %vm294, %v296, %v292
    %v298 = vmul.f32 %v256, %v297
    %v299 = vrcp.pop %v231
    %v300 = vmul.f32 %v231, %v299
    %v301 = vsub.f32 1.0, %v300
    %v302 = vmul.f32 %v299, %v301
    %v303 = vadd.f32 %v299, %v302
    %vm304 = vweird.f32 %v231
    %vm305 = vweird.f32 %v299
    %vm306 = vmor %vm304, %vm305
    %v307 = vsel %vm306, %v299, %v303
    %v308 = vand.u32 2147483647, %v231
    %vm309 = vcmp.eq.f32.partialorder %v308, 8.507059e+37
    %v310 = vand.u32 %v231, 2147483648
    %v311 = vor.u32 1.1754944e-38, %v310
    %v312 = vsel %vm309, %v311, %v307
    %v313 = vmul.f32 %v282, %v312
    %314 = vrot.lane.b32.xlu0 %v148, 120
    %v315 = vpop.permute.xlu0 %314
    %316 = vrot.lane.b32.xlu0 %v148, 88
    %v317 = vpop.permute.xlu0 %316
    %v318 = vsel %vm162, %v315, 0
    %v320 = vsel %vm162, %v317, 0
    %322 = vmatpush.xpose.msra.mxu0 0.0
    %323 = vmatpush.xpose.msra.mxu0 0.0
    %324 = vmatpush.xpose.msra.mxu0 0.0
    %325 = vmatpush.xpose.msra.mxu0 0.0
    %326 = vmatpush.xpose.msra.mxu0 0.0
    %327 = vmatpush.xpose.msra.mxu0 0.0
    %328 = vmatpush.xpose.msra.mxu0 0.0
    %329 = vmatpush.xpose.msra.mxu0 0.0
    %330 = vmatpush.xpose.msra.mxu0 0.0
    %331 = vmatpush.xpose.msra.mxu0 0.0
    %332 = vmatpush.xpose.msra.mxu0 0.0
    %333 = vmatpush.xpose.msra.mxu0 0.0
    %334 = vmatpush.xpose.msra.mxu0 0.0
    %335 = vmatpush.xpose.msra.mxu0 0.0
    %336 = vmatpush.xpose.msra.mxu0 0.0
    %337 = vmatpush.xpose.msra.mxu0 %v320
    %338 = vmatmul.f32.gmra.mxu0 %v318
    %v339 = vpop.f32.mrf.mxu0
    %v340 = vadd.f32 %v155, %v339
    %341 = vdwg.mxu0
    %342 = vrot.lane.b32.xlu0 %v151, 120
    %v343 = vpop.permute.xlu0 %342
    %344 = vrot.lane.b32.xlu0 %v151, 88
    %v345 = vpop.permute.xlu0 %344
    %v346 = vsel %vm162, %v343, 0
    %v348 = vsel %vm162, %v345, 0
    %350 = vmatpush.xpose.msra.mxu0 0.0
    %351 = vmatpush.xpose.msra.mxu0 0.0
    %352 = vmatpush.xpose.msra.mxu0 0.0
    %353 = vmatpush.xpose.msra.mxu0 0.0
    %354 = vmatpush.xpose.msra.mxu0 0.0
    %355 = vmatpush.xpose.msra.mxu0 0.0
    %356 = vmatpush.xpose.msra.mxu0 0.0
    %357 = vmatpush.xpose.msra.mxu0 0.0
    %358 = vmatpush.xpose.msra.mxu0 0.0
    %359 = vmatpush.xpose.msra.mxu0 0.0
    %360 = vmatpush.xpose.msra.mxu0 0.0
    %361 = vmatpush.xpose.msra.mxu0 0.0
    %362 = vmatpush.xpose.msra.mxu0 0.0
    %363 = vmatpush.xpose.msra.mxu0 0.0
    %364 = vmatpush.xpose.msra.mxu0 0.0
    %365 = vmatpush.xpose.msra.mxu0 %v348
    %366 = vmatmul.f32.gmra.mxu0 %v346
    %v367 = vpop.f32.mrf.mxu0
    %v368 = vadd.f32 %v156, %v367
    %369 = vdwg.mxu0
    %v370 = vsel %vm162, %v340, -inf
    %371 = vmax.xlane.f32.xlu0 %v370
    %v372 = vpop.xlane.xlu0 %371
    %v373 = vsel %vm162, %v368, -inf
    %374 = vmax.xlane.f32.xlu0 %v373
    %v375 = vpop.xlane.xlu0 %374
    %v376 = vsub.f32 %v340, %v372
    %v377 = vsub.f32 %v368, %v375
    %v378 = vmul.f32 %v376, 1.442695
    %v379 = vpow.pop %v378
    %v380 = vmul.f32 %v377, 1.442695
    %v381 = vpow.pop %v380
    %v382 = vsel %vm162, %v379, 0.0
    %383 = vadd.xlane.f32.xlu0 %v382
    %v384 = vpop.xlane.xlu0 %383
    %v385 = vsel %vm162, %v381, 0.0
    %386 = vadd.xlane.f32.xlu0 %v385
    %v387 = vpop.xlane.xlu0 %386
    %388 = vrot.lane.b32.xlu0 %v148, 56
    %v389 = vpop.permute.xlu0 %388
    %v392 = vsel %vm162, %v379, 0
    %394 = vmatpush.msra.mxu0 0.0
    %395 = vmatpush.msra.mxu0 0.0
    %396 = vmatpush.msra.mxu0 0.0
    %397 = vmatpush.msra.mxu0 0.0
    %398 = vmatpush.msra.mxu0 0.0
    %399 = vmatpush.msra.mxu0 0.0
    %400 = vmatpush.msra.mxu0 0.0
    %401 = vmatpush.msra.mxu0 0.0
    %402 = vmatpush.msra.mxu0 0.0
    %403 = vmatpush.msra.mxu0 0.0
    %404 = vmatpush.msra.mxu0 0.0
    %405 = vmatpush.msra.mxu0 0.0
    %406 = vmatpush.msra.mxu0 0.0
    %407 = vmatpush.msra.mxu0 0.0
    %408 = vmatpush.msra.mxu0 0.0
    %409 = vmatpush.msra.mxu0 %v389
    %410 = vmatmul.f32.gmra.mxu0 %v392
    %v411 = vpop.f32.mrf.mxu0
    %v412 = vadd.f32 0.0, %v411
    %413 = vdwg.mxu0
    %414 = vrot.lane.b32.xlu0 %v151, 56
    %v415 = vpop.permute.xlu0 %414
    %v418 = vsel %vm162, %v381, 0
    %420 = vmatpush.msra.mxu0 0.0
    %421 = vmatpush.msra.mxu0 0.0
    %422 = vmatpush.msra.mxu0 0.0
    %423 = vmatpush.msra.mxu0 0.0
    %424 = vmatpush.msra.mxu0 0.0
    %425 = vmatpush.msra.mxu0 0.0
    %426 = vmatpush.msra.mxu0 0.0
    %427 = vmatpush.msra.mxu0 0.0
    %428 = vmatpush.msra.mxu0 0.0
    %429 = vmatpush.msra.mxu0 0.0
    %430 = vmatpush.msra.mxu0 0.0
    %431 = vmatpush.msra.mxu0 0.0
    %432 = vmatpush.msra.mxu0 0.0
    %433 = vmatpush.msra.mxu0 0.0
    %434 = vmatpush.msra.mxu0 0.0
    %435 = vmatpush.msra.mxu0 %v415
    %436 = vmatmul.f32.gmra.mxu0 %v418
    %v437 = vpop.f32.mrf.mxu0
    %v438 = vadd.f32 0.0, %v437
    %439 = vdwg.mxu0
    %v440 = vrcp.pop %v384
    %v441 = vmul.f32 %v384, %v440
    %v442 = vsub.f32 1.0, %v441
    %v443 = vmul.f32 %v440, %v442
    %v444 = vadd.f32 %v440, %v443
    %vm445 = vweird.f32 %v384
    %vm446 = vweird.f32 %v440
    %vm447 = vmor %vm445, %vm446
    %v448 = vsel %vm447, %v440, %v444
    %v449 = vand.u32 2147483647, %v384
    %vm450 = vcmp.eq.f32.partialorder %v449, 8.507059e+37
    %v451 = vand.u32 %v384, 2147483648
    %v452 = vor.u32 1.1754944e-38, %v451
    %v453 = vsel %vm450, %v452, %v448
    %v454 = vmul.f32 %v412, %v453
    %v455 = vrcp.pop %v387
    %v456 = vmul.f32 %v387, %v455
    %v457 = vsub.f32 1.0, %v456
    %v458 = vmul.f32 %v455, %v457
    %v459 = vadd.f32 %v455, %v458
    %vm460 = vweird.f32 %v387
    %vm461 = vweird.f32 %v455
    %vm462 = vmor %vm460, %vm461
    %v463 = vsel %vm462, %v455, %v459
    %v464 = vand.u32 2147483647, %v387
    %vm465 = vcmp.eq.f32.partialorder %v464, 8.507059e+37
    %v466 = vand.u32 %v387, 2147483648
    %v467 = vor.u32 1.1754944e-38, %v466
    %v468 = vsel %vm465, %v467, %v463
    %v469 = vmul.f32 %v438, %v468
    %470 = vrot.lane.b32.xlu0 %v148, 112
    %v471 = vpop.permute.xlu0 %470
    %472 = vrot.lane.b32.xlu0 %v148, 80
    %v473 = vpop.permute.xlu0 %472
    %v474 = vsel %vm162, %v471, 0
    %v476 = vsel %vm162, %v473, 0
    %478 = vmatpush.xpose.msra.mxu0 0.0
    %479 = vmatpush.xpose.msra.mxu0 0.0
    %480 = vmatpush.xpose.msra.mxu0 0.0
    %481 = vmatpush.xpose.msra.mxu0 0.0
    %482 = vmatpush.xpose.msra.mxu0 0.0
    %483 = vmatpush.xpose.msra.mxu0 0.0
    %484 = vmatpush.xpose.msra.mxu0 0.0
    %485 = vmatpush.xpose.msra.mxu0 0.0
    %486 = vmatpush.xpose.msra.mxu0 0.0
    %487 = vmatpush.xpose.msra.mxu0 0.0
    %488 = vmatpush.xpose.msra.mxu0 0.0
    %489 = vmatpush.xpose.msra.mxu0 0.0
    %490 = vmatpush.xpose.msra.mxu0 0.0
    %491 = vmatpush.xpose.msra.mxu0 0.0
    %492 = vmatpush.xpose.msra.mxu0 0.0
    %493 = vmatpush.xpose.msra.mxu0 %v476
    %494 = vmatmul.f32.gmra.mxu0 %v474
    %v495 = vpop.f32.mrf.mxu0
    %v496 = vadd.f32 %v155, %v495
    %497 = vdwg.mxu0
    %498 = vrot.lane.b32.xlu0 %v151, 112
    %v499 = vpop.permute.xlu0 %498
    %500 = vrot.lane.b32.xlu0 %v151, 80
    %v501 = vpop.permute.xlu0 %500
    %v502 = vsel %vm162, %v499, 0
    %v504 = vsel %vm162, %v501, 0
    %506 = vmatpush.xpose.msra.mxu0 0.0
    %507 = vmatpush.xpose.msra.mxu0 0.0
    %508 = vmatpush.xpose.msra.mxu0 0.0
    %509 = vmatpush.xpose.msra.mxu0 0.0
    %510 = vmatpush.xpose.msra.mxu0 0.0
    %511 = vmatpush.xpose.msra.mxu0 0.0
    %512 = vmatpush.xpose.msra.mxu0 0.0
    %513 = vmatpush.xpose.msra.mxu0 0.0
    %514 = vmatpush.xpose.msra.mxu0 0.0
    %515 = vmatpush.xpose.msra.mxu0 0.0
    %516 = vmatpush.xpose.msra.mxu0 0.0
    %517 = vmatpush.xpose.msra.mxu0 0.0
    %518 = vmatpush.xpose.msra.mxu0 0.0
    %519 = vmatpush.xpose.msra.mxu0 0.0
    %520 = vmatpush.xpose.msra.mxu0 0.0
    %521 = vmatpush.xpose.msra.mxu0 %v504
    %522 = vmatmul.f32.gmra.mxu0 %v502
    %v523 = vpop.f32.mrf.mxu0
    %v524 = vadd.f32 %v156, %v523
    %525 = vdwg.mxu0
    %v526 = vsel %vm162, %v496, -inf
    %527 = vmax.xlane.f32.xlu0 %v526
    %v528 = vpop.xlane.xlu0 %527
    %v529 = vsel %vm162, %v524, -inf
    %530 = vmax.xlane.f32.xlu0 %v529
    %v531 = vpop.xlane.xlu0 %530
    %v532 = vsub.f32 %v496, %v528
    %v533 = vsub.f32 %v524, %v531
    %v534 = vmul.f32 %v532, 1.442695
    %v535 = vpow.pop %v534
    %v536 = vmul.f32 %v533, 1.442695
    %v537 = vpow.pop %v536
    %v538 = vsel %vm162, %v535, 0.0
    %539 = vadd.xlane.f32.xlu0 %v538
    %v540 = vpop.xlane.xlu0 %539
    %v541 = vsel %vm162, %v537, 0.0
    %542 = vadd.xlane.f32.xlu0 %v541
    %v543 = vpop.xlane.xlu0 %542
    %544 = vrot.lane.b32.xlu0 %v148, 48
    %v545 = vpop.permute.xlu0 %544
    %v548 = vsel %vm162, %v535, 0
    %550 = vmatpush.msra.mxu0 0.0
    %551 = vmatpush.msra.mxu0 0.0
    %552 = vmatpush.msra.mxu0 0.0
    %553 = vmatpush.msra.mxu0 0.0
    %554 = vmatpush.msra.mxu0 0.0
    %555 = vmatpush.msra.mxu0 0.0
    %556 = vmatpush.msra.mxu0 0.0
    %557 = vmatpush.msra.mxu0 0.0
    %558 = vmatpush.msra.mxu0 0.0
    %559 = vmatpush.msra.mxu0 0.0
    %560 = vmatpush.msra.mxu0 0.0
    %561 = vmatpush.msra.mxu0 0.0
    %562 = vmatpush.msra.mxu0 0.0
    %563 = vmatpush.msra.mxu0 0.0
    %564 = vmatpush.msra.mxu0 0.0
    %565 = vmatpush.msra.mxu0 %v545
    %566 = vmatmul.f32.gmra.mxu0 %v548
    %v567 = vpop.f32.mrf.mxu0
    %v568 = vadd.f32 0.0, %v567
    %569 = vdwg.mxu0
    %570 = vrot.lane.b32.xlu0 %v151, 48
    %v571 = vpop.permute.xlu0 %570
    %v574 = vsel %vm162, %v537, 0
    %576 = vmatpush.msra.mxu0 0.0
    %577 = vmatpush.msra.mxu0 0.0
    %578 = vmatpush.msra.mxu0 0.0
    %579 = vmatpush.msra.mxu0 0.0
    %580 = vmatpush.msra.mxu0 0.0
    %581 = vmatpush.msra.mxu0 0.0
    %582 = vmatpush.msra.mxu0 0.0
    %583 = vmatpush.msra.mxu0 0.0
    %584 = vmatpush.msra.mxu0 0.0
    %585 = vmatpush.msra.mxu0 0.0
    %586 = vmatpush.msra.mxu0 0.0
    %587 = vmatpush.msra.mxu0 0.0
    %588 = vmatpush.msra.mxu0 0.0
    %589 = vmatpush.msra.mxu0 0.0
    %590 = vmatpush.msra.mxu0 0.0
    %591 = vmatpush.msra.mxu0 %v571
    %592 = vmatmul.f32.gmra.mxu0 %v574
    %v593 = vpop.f32.mrf.mxu0
    %v594 = vadd.f32 0.0, %v593
    %595 = vdwg.mxu0
    %v596 = vrcp.pop %v540
    %v597 = vmul.f32 %v540, %v596
    %v598 = vsub.f32 1.0, %v597
    %v599 = vmul.f32 %v596, %v598
    %v600 = vadd.f32 %v596, %v599
    %vm601 = vweird.f32 %v540
    %vm602 = vweird.f32 %v596
    %vm603 = vmor %vm601, %vm602
    %v604 = vsel %vm603, %v596, %v600
    %v605 = vand.u32 2147483647, %v540
    %vm606 = vcmp.eq.f32.partialorder %v605, 8.507059e+37
    %v607 = vand.u32 %v540, 2147483648
    %v608 = vor.u32 1.1754944e-38, %v607
    %v609 = vsel %vm606, %v608, %v604
    %v610 = vmul.f32 %v568, %v609
    %v611 = vrcp.pop %v543
    %v612 = vmul.f32 %v543, %v611
    %v613 = vsub.f32 1.0, %v612
    %v614 = vmul.f32 %v611, %v613
    %v615 = vadd.f32 %v611, %v614
    %vm616 = vweird.f32 %v543
    %vm617 = vweird.f32 %v611
    %vm618 = vmor %vm616, %vm617
    %v619 = vsel %vm618, %v611, %v615
    %v620 = vand.u32 2147483647, %v543
    %vm621 = vcmp.eq.f32.partialorder %v620, 8.507059e+37
    %v622 = vand.u32 %v543, 2147483648
    %v623 = vor.u32 1.1754944e-38, %v622
    %v624 = vsel %vm621, %v623, %v619
    %v625 = vmul.f32 %v594, %v624
    %626 = vrot.lane.b32.xlu0 %v148, 104
    %v627 = vpop.permute.xlu0 %626
    %628 = vrot.lane.b32.xlu0 %v148, 72
    %v629 = vpop.permute.xlu0 %628
    %v630 = vsel %vm162, %v627, 0
    %v632 = vsel %vm162, %v629, 0
    %634 = vmatpush.xpose.msra.mxu0 0.0
    %635 = vmatpush.xpose.msra.mxu0 0.0
    %636 = vmatpush.xpose.msra.mxu0 0.0
    %637 = vmatpush.xpose.msra.mxu0 0.0
    %638 = vmatpush.xpose.msra.mxu0 0.0
    %639 = vmatpush.xpose.msra.mxu0 0.0
    %640 = vmatpush.xpose.msra.mxu0 0.0
    %641 = vmatpush.xpose.msra.mxu0 0.0
    %642 = vmatpush.xpose.msra.mxu0 0.0
    %643 = vmatpush.xpose.msra.mxu0 0.0
    %644 = vmatpush.xpose.msra.mxu0 0.0
    %645 = vmatpush.xpose.msra.mxu0 0.0
    %646 = vmatpush.xpose.msra.mxu0 0.0
    %647 = vmatpush.xpose.msra.mxu0 0.0
    %648 = vmatpush.xpose.msra.mxu0 0.0
    %649 = vmatpush.xpose.msra.mxu0 %v632
    %650 = vmatmul.f32.gmra.mxu0 %v630
    %v651 = vpop.f32.mrf.mxu0
    %v652 = vadd.f32 %v155, %v651
    %653 = vdwg.mxu0
    %654 = vrot.lane.b32.xlu0 %v151, 104
    %v655 = vpop.permute.xlu0 %654
    %656 = vrot.lane.b32.xlu0 %v151, 72
    %v657 = vpop.permute.xlu0 %656
    %v658 = vsel %vm162, %v655, 0
    %v660 = vsel %vm162, %v657, 0
    %662 = vmatpush.xpose.msra.mxu0 0.0
    %663 = vmatpush.xpose.msra.mxu0 0.0
    %664 = vmatpush.xpose.msra.mxu0 0.0
    %665 = vmatpush.xpose.msra.mxu0 0.0
    %666 = vmatpush.xpose.msra.mxu0 0.0
    %667 = vmatpush.xpose.msra.mxu0 0.0
    %668 = vmatpush.xpose.msra.mxu0 0.0
    %669 = vmatpush.xpose.msra.mxu0 0.0
    %670 = vmatpush.xpose.msra.mxu0 0.0
    %671 = vmatpush.xpose.msra.mxu0 0.0
    %672 = vmatpush.xpose.msra.mxu0 0.0
    %673 = vmatpush.xpose.msra.mxu0 0.0
    %674 = vmatpush.xpose.msra.mxu0 0.0
    %675 = vmatpush.xpose.msra.mxu0 0.0
    %676 = vmatpush.xpose.msra.mxu0 0.0
    %677 = vmatpush.xpose.msra.mxu0 %v660
    %678 = vmatmul.f32.gmra.mxu0 %v658
    %v679 = vpop.f32.mrf.mxu0
    %v680 = vadd.f32 %v156, %v679
    %681 = vdwg.mxu0
    %v682 = vsel %vm162, %v652, -inf
    %683 = vmax.xlane.f32.xlu0 %v682
    %v684 = vpop.xlane.xlu0 %683
    %v685 = vsel %vm162, %v680, -inf
    %686 = vmax.xlane.f32.xlu0 %v685
    %v687 = vpop.xlane.xlu0 %686
    %v688 = vsub.f32 %v652, %v684
    %v689 = vsub.f32 %v680, %v687
    %v690 = vmul.f32 %v688, 1.442695
    %v691 = vpow.pop %v690
    %v692 = vmul.f32 %v689, 1.442695
    %v693 = vpow.pop %v692
    %v694 = vsel %vm162, %v691, 0.0
    %695 = vadd.xlane.f32.xlu0 %v694
    %v696 = vpop.xlane.xlu0 %695
    %v697 = vsel %vm162, %v693, 0.0
    %698 = vadd.xlane.f32.xlu0 %v697
    %v699 = vpop.xlane.xlu0 %698
    %700 = vrot.lane.b32.xlu0 %v148, 40
    %v701 = vpop.permute.xlu0 %700
    %v704 = vsel %vm162, %v691, 0
    %706 = vmatpush.msra.mxu0 0.0
    %707 = vmatpush.msra.mxu0 0.0
    %708 = vmatpush.msra.mxu0 0.0
    %709 = vmatpush.msra.mxu0 0.0
    %710 = vmatpush.msra.mxu0 0.0
    %711 = vmatpush.msra.mxu0 0.0
    %712 = vmatpush.msra.mxu0 0.0
    %713 = vmatpush.msra.mxu0 0.0
    %714 = vmatpush.msra.mxu0 0.0
    %715 = vmatpush.msra.mxu0 0.0
    %716 = vmatpush.msra.mxu0 0.0
    %717 = vmatpush.msra.mxu0 0.0
    %718 = vmatpush.msra.mxu0 0.0
    %719 = vmatpush.msra.mxu0 0.0
    %720 = vmatpush.msra.mxu0 0.0
    %721 = vmatpush.msra.mxu0 %v701
    %722 = vmatmul.f32.gmra.mxu0 %v704
    %v723 = vpop.f32.mrf.mxu0
    %v724 = vadd.f32 0.0, %v723
    %725 = vdwg.mxu0
    %726 = vrot.lane.b32.xlu0 %v151, 40
    %v727 = vpop.permute.xlu0 %726
    %v730 = vsel %vm162, %v693, 0
    %732 = vmatpush.msra.mxu0 0.0
    %733 = vmatpush.msra.mxu0 0.0
    %734 = vmatpush.msra.mxu0 0.0
    %735 = vmatpush.msra.mxu0 0.0
    %736 = vmatpush.msra.mxu0 0.0
    %737 = vmatpush.msra.mxu0 0.0
    %738 = vmatpush.msra.mxu0 0.0
    %739 = vmatpush.msra.mxu0 0.0
    %740 = vmatpush.msra.mxu0 0.0
    %741 = vmatpush.msra.mxu0 0.0
    %742 = vmatpush.msra.mxu0 0.0
    %743 = vmatpush.msra.mxu0 0.0
    %744 = vmatpush.msra.mxu0 0.0
    %745 = vmatpush.msra.mxu0 0.0
    %746 = vmatpush.msra.mxu0 0.0
    %747 = vmatpush.msra.mxu0 %v727
    %748 = vmatmul.f32.gmra.mxu0 %v730
    %v749 = vpop.f32.mrf.mxu0
    %v750 = vadd.f32 0.0, %v749
    %751 = vdwg.mxu0
    %v752 = vrcp.pop %v696
    %v753 = vmul.f32 %v696, %v752
    %v754 = vsub.f32 1.0, %v753
    %v755 = vmul.f32 %v752, %v754
    %v756 = vadd.f32 %v752, %v755
    %vm757 = vweird.f32 %v696
    %vm758 = vweird.f32 %v752
    %vm759 = vmor %vm757, %vm758
    %v760 = vsel %vm759, %v752, %v756
    %v761 = vand.u32 2147483647, %v696
    %vm762 = vcmp.eq.f32.partialorder %v761, 8.507059e+37
    %v763 = vand.u32 %v696, 2147483648
    %v764 = vor.u32 1.1754944e-38, %v763
    %v765 = vsel %vm762, %v764, %v760
    %v766 = vmul.f32 %v724, %v765
    %v767 = vrcp.pop %v699
    %v768 = vmul.f32 %v699, %v767
    %v769 = vsub.f32 1.0, %v768
    %v770 = vmul.f32 %v767, %v769
    %v771 = vadd.f32 %v767, %v770
    %vm772 = vweird.f32 %v699
    %vm773 = vweird.f32 %v767
    %vm774 = vmor %vm772, %vm773
    %v775 = vsel %vm774, %v767, %v771
    %v776 = vand.u32 2147483647, %v699
    %vm777 = vcmp.eq.f32.partialorder %v776, 8.507059e+37
    %v778 = vand.u32 %v699, 2147483648
    %v779 = vor.u32 1.1754944e-38, %v778
    %v780 = vsel %vm777, %v779, %v775
    %v781 = vmul.f32 %v750, %v780
    %784 = vrot.lane.b32.xlu0 %v454, 8
    %v785 = vpop.permute.xlu0 %784
    %786 = vrot.lane.b32.xlu0 %v469, 8
    %v787 = vpop.permute.xlu0 %786
    %792 = vrot.lane.b32.xlu0 %v610, 16
    %v793 = vpop.permute.xlu0 %792
    %794 = vrot.lane.b32.xlu0 %v625, 16
    %v795 = vpop.permute.xlu0 %794
    %800 = vrot.lane.b32.xlu0 %v766, 24
    %v801 = vpop.permute.xlu0 %800
    %802 = vrot.lane.b32.xlu0 %v781, 24
    %v803 = vpop.permute.xlu0 %802
    %v806 = vsel %vm162, %v298, %v785
    %v807 = vsel %vm162, %v313, %v787
    %vm808 = vcmask 130048
    %v809 = vsel %vm808, %v806, %v793
    %v810 = vsel %vm808, %v807, %v795
    %vm811 = vcmask 195584
    %v812 = vsel %vm811, %v809, %v801
    %v813 = vsel %vm811, %v810, %v803
    %v814 = vld [vmem:[%s6] sm:$0xff]
    %v815 = vld [vmem:[%s6 + $0x8] sm:$0xff]
    %v816 = vld [vmem:[%s6 + $0x10] sm:$0xff]
    %v817 = vld [vmem:[%s6 + $0x18] sm:$0xff]
    %v818 = vld [vmem:[%s7] sm:$0x1]
    %v820 = vperm.slane %v818, 0
    %v823 = vsel %vm54, %v812, 0
    %v826 = vsel %vm54, %v813, 0
    %828 = vmatpush.msra.mxu0 0.0
    %829 = vmatpush.msra.mxu0 0.0
    %830 = vmatpush.msra.mxu0 0.0
    %831 = vmatpush.msra.mxu0 0.0
    %832 = vmatpush.msra.mxu0 0.0
    %833 = vmatpush.msra.mxu0 0.0
    %834 = vmatpush.msra.mxu0 0.0
    %835 = vmatpush.msra.mxu0 0.0
    %836 = vmatpush.msra.mxu0 0.0
    %837 = vmatpush.msra.mxu0 0.0
    %838 = vmatpush.msra.mxu0 0.0
    %839 = vmatpush.msra.mxu0 0.0
    %840 = vmatpush.msra.mxu0 %v817
    %841 = vmatpush.msra.mxu0 %v816
    %842 = vmatpush.msra.mxu0 %v815
    %843 = vmatpush.msra.mxu0 %v814
    %844 = vmatmul.f32.gmra.mxu0 %v823
    %v845 = vpop.f32.mrf.mxu0
    %v846 = vadd.f32 %v820, %v845
    %847 = vmatmul.f32.gmra.mxu0 %v826
    %v848 = vpop.f32.mrf.mxu0
    %v849 = vadd.f32 %v820, %v848
    %850 = vdwg.mxu0
    %v851 = vadd.f32 %v48, %v846
    %v852 = vadd.f32 %v49, %v849
    %v853 = vld [vmem:[%s8] sm:$0x1]
    %v854 = vld [vmem:[%s9] sm:$0x1]
    %v855 = vsel %vm54, %v851, 0.0
    %856 = vadd.xlane.f32.xlu0 %v855
    %v857 = vpop.xlane.xlu0 %856
    %v858 = vsel %vm54, %v852, 0.0
    %859 = vadd.xlane.f32.xlu0 %v858
    %v860 = vpop.xlane.xlu0 %859
    %v861 = vmul.f32 %v857, %v67
    %v862 = vmul.f32 %v860, %v67
    %v863 = vsub.f32 %v851, %v861
    %v864 = vsub.f32 %v852, %v862
    %v865 = vmul.f32 %v863, %v863
    %v866 = vmul.f32 %v864, %v864
    %v867 = vsel %vm54, %v865, 0.0
    %868 = vadd.xlane.f32.xlu0 %v867
    %v869 = vpop.xlane.xlu0 %868
    %v870 = vsel %vm54, %v866, 0.0
    %871 = vadd.xlane.f32.xlu0 %v870
    %v872 = vpop.xlane.xlu0 %871
    %v873 = vmul.f32 %v869, %v67
    %v874 = vmul.f32 %v872, %v67
    %v875 = vadd.f32 %v873, 1e-05
    %v876 = vadd.f32 %v874, 1e-05
    %v877 = vrsqrt.pop %v875
    %v878 = vmul.f32 %v877, %v875
    %v879 = vmul.f32 %v878, %v877
    %v880 = vmul.f32 0.5, %v879
    %v881 = vsub.f32 1.5, %v880
    %v882 = vmul.f32 %v877, %v881
    %vm883 = vweird.f32 %v875
    %vm884 = vweird.f32 %v877
    %vm885 = vmor %vm883, %vm884
    %v886 = vsel %vm885, %v877, %v882
    %v887 = vrsqrt.pop %v876
    %v888 = vmul.f32 %v887, %v876
    %v889 = vmul.f32 %v888, %v887
    %v890 = vmul.f32 0.5, %v889
    %v891 = vsub.f32 1.5, %v890
    %v892 = vmul.f32 %v887, %v891
    %vm893 = vweird.f32 %v876
    %vm894 = vweird.f32 %v887
    %vm895 = vmor %vm893, %vm894
    %v896 = vsel %vm895, %v887, %v892
    %v897 = vmul.f32 %v863, %v886
    %v898 = vmul.f32 %v864, %v896
    %v900 = vperm.slane %v853, 0
    %v902 = vmul.f32 %v897, %v900
    %v903 = vmul.f32 %v898, %v900
    %v905 = vperm.slane %v854, 0
    %v907 = vadd.f32 %v902, %v905
    %v908 = vadd.f32 %v903, %v905
    %v909 = vld [vmem:[%s10] sm:$0xff]
    %v910 = vld [vmem:[%s10 + $0x8] sm:$0xff]
    %v911 = vld [vmem:[%s10 + $0x10] sm:$0xff]
    %v912 = vld [vmem:[%s10 + $0x18] sm:$0xff]
    %v913 = vld [vmem:[%s11] sm:$0x1]
    %v915 = vperm.slane %v913, 0
    %v918 = vsel %vm54, %v907, 0
    %v921 = vsel %vm54, %v908, 0
    %923 = vmatpush.msra.mxu0 0.0
    %924 = vmatpush.msra.mxu0 0.0
    %925 = vmatpush.msra.mxu0 0.0
    %926 = vmatpush.msra.mxu0 0.0
    %927 = vmatpush.msra.mxu0 0.0
    %928 = vmatpush.msra.mxu0 0.0
    %929 = vmatpush.msra.mxu0 0.0
    %930 = vmatpush.msra.mxu0 0.0
    %931 = vmatpush.msra.mxu0 0.0
    %932 = vmatpush.msra.mxu0 0.0
    %933 = vmatpush.msra.mxu0 0.0
    %934 = vmatpush.msra.mxu0 0.0
    %935 = vmatpush.msra.mxu0 %v912
    %936 = vmatpush.msra.mxu0 %v911
    %937 = vmatpush.msra.mxu0 %v910
    %938 = vmatpush.msra.mxu0 %v909
    %939 = vmatmul.f32.gmra.mxu0 %v918
    %v940 = vpop.f32.mrf.mxu0
    %v941 = vadd.f32 %v915, %v940
    %942 = vmatmul.f32.gmra.mxu0 %v921
    %v943 = vpop.f32.mrf.mxu0
    %v944 = vadd.f32 %v915, %v943
    %945 = vdwg.mxu0
    %v946 = vmul.f32 %v941, 0.5
    %v947 = vmul.f32 %v944, 0.5
    %v948 = vmul.f32 %v941, 0.044715
    %v949 = vmul.f32 %v944, 0.044715
    %v950 = vmul.f32 %v948, %v941
    %v951 = vmul.f32 %v949, %v944
    %v952 = vmul.f32 %v950, %v941
    %v953 = vmul.f32 %v951, %v944
    %v954 = vadd.f32 %v941, %v952
    %v955 = vadd.f32 %v944, %v953
    %v956 = vmul.f32 %v954, 0.7978846
    %v957 = vmul.f32 %v955, 0.7978846
    %v958 = vtanh.pop %v956
    %v959 = vtanh.pop %v957
    %v960 = vadd.f32 %v958, 1.0
    %v961 = vadd.f32 %v959, 1.0
    %v962 = vmul.f32 %v946, %v960
    %v963 = vmul.f32 %v947, %v961
    %v964 = vld [vmem:[%s12] sm:$0xff]
    %v965 = vld [vmem:[%s12 + $0x8] sm:$0xff]
    %v966 = vld [vmem:[%s12 + $0x10] sm:$0xff]
    %v967 = vld [vmem:[%s12 + $0x18] sm:$0xff]
    %v968 = vld [vmem:[%s12 + $0x20] sm:$0xff]
    %v969 = vld [vmem:[%s12 + $0x28] sm:$0xff]
    %v970 = vld [vmem:[%s12 + $0x30] sm:$0xff]
    %v971 = vld [vmem:[%s12 + $0x38] sm:$0xff]
    %v972 = vld [vmem:[%s12 + $0x40] sm:$0xff]
    %v973 = vld [vmem:[%s12 + $0x48] sm:$0xff]
    %v974 = vld [vmem:[%s12 + $0x50] sm:$0xff]
    %v975 = vld [vmem:[%s12 + $0x58] sm:$0xff]
    %v976 = vld [vmem:[%s12 + $0x60] sm:$0xff]
    %v977 = vld [vmem:[%s12 + $0x68] sm:$0xff]
    %v978 = vld [vmem:[%s12 + $0x70] sm:$0xff]
    %v979 = vld [vmem:[%s12 + $0x78] sm:$0xff]
    %v980 = vld [vmem:[%s13] sm:$0x1]
    %v982 = vperm.slane %v980, 0
    %984 = vmatpush.msra.mxu0 %v979
    %985 = vmatpush.msra.mxu0 %v978
    %986 = vmatpush.msra.mxu0 %v977
    %987 = vmatpush.msra.mxu0 %v976
    %988 = vmatpush.msra.mxu0 %v975
    %989 = vmatpush.msra.mxu0 %v974
    %990 = vmatpush.msra.mxu0 %v973
    %991 = vmatpush.msra.mxu0 %v972
    %992 = vmatpush.msra.mxu0 %v971
    %993 = vmatpush.msra.mxu0 %v970
    %994 = vmatpush.msra.mxu0 %v969
    %995 = vmatpush.msra.mxu0 %v968
    %996 = vmatpush.msra.mxu0 %v967
    %997 = vmatpush.msra.mxu0 %v966
    %998 = vmatpush.msra.mxu0 %v965
    %999 = vmatpush.msra.mxu0 %v964
    %1000 = vmatmul.f32.gmra.mxu0 %v962
    %v1001 = vpop.f32.mrf.mxu0
    %v1002 = vadd.f32 %v982, %v1001
    %1003 = vmatmul.f32.gmra.mxu0 %v963
    %v1004 = vpop.f32.mrf.mxu0
    %v1005 = vadd.f32 %v982, %v1004
    %1006 = vdwg.mxu0
    %v1007 = vadd.f32 %v851, %v1002
    %v1008 = vadd.f32 %v852, %v1005
    %1009 = vst.msk [vmem:[#allocation2] sm:$0xff] %vm54, %v1007
    %1010 = vst.msk [vmem:[#allocation2 + $0x8] sm:$0xff] %vm54, %v1008
    // Predicated region
    $region58: #{tpu_custom_call.1} parent=1 // pred_check
      _
    $region59: #{tpu_custom_call.1} parent=1 // pred_check_branch
      %1012 = sbr.rel (0) target = $region61
    $region60: #{tpu_custom_call.1} parent=1 // pred_region
      %1014 = vsyncadd [#allocation3], 0
      %s1015 = sshll.u32 [#allocation2], 4
      %s1016 = int_to_ptr.vmem [resolvable:$true] %s1015
      %s1017 = sshll.u32 %s14, 4
      %s1018 = int_to_ptr.hbm [resolvable:$true] %s1017
      %1023 = dma.vmem_to_hbm [thread:$0]  %s1016, 256, %s1018, [#allocation3], 128, 128, 8
    $region61: #{tpu_custom_call.1} parent=1 // pred_fallthru
      _
    // Predicated region
    $region62: #{tpu_custom_call.1} parent=1 // pred_check
      _
    $region63: #{tpu_custom_call.1} parent=1 // pred_check_branch
      %1025 = sbr.rel (0) target = $region65
    $region64: #{tpu_custom_call.1} parent=1 // pred_region
      %1027 = dma.done [#allocation3], 256
    $region65: #{tpu_custom_call.1} parent=1 // pred_fallthru
      _
    %1028 = vsyncpa [#allocation3], 1

</llo_original>
